<compile_context>
chip_gen: v7x
topology: tpu7x:2x2x1
jax: 0.10.0
libtpu: 0.0.40
codegen_flags: <defaults>
</compile_context>

<pallas_src>
import functools

import jax
import jax.numpy as jnp
import numpy as np
from jax import lax
from jax.experimental import pallas as pl
from jax.experimental.pallas import tpu as pltpu

# Conv geometry for a 16x16 single-channel input:
#   conv1: 1->8,   k3 s2 p1 : 16x16 -> 8x8
#   conv2: 8->16,  k3 s2 p1 : 8x8   -> 4x4
#   conv3: 16->32, k3 s2 p0 : 4x4   -> 1x1
_CONV_GEOM = (
    (16, 16, 8, 8, 2, 1),   # Hin, Win, Ho, Wo, stride, pad
    (8, 8, 4, 4, 2, 1),
    (4, 4, 1, 1, 2, 0),
)
_LANE = 128
_TB_MAX = 256               # batch tile (multiple of 256 -> fills v6e/v7x MXU)


def _round_up(n, m):
    return ((n + m - 1) // m) * m


def _gather_mats(Hin, Win, Ho, Wo, stride, pad):
    """S[k, p_out, q_in] = 1 iff input pixel q_in feeds output pixel p_out at
    3x3 kernel offset k = kh*3+kw (zero rows encode zero padding)."""
    S = np.zeros((9, Ho * Wo, Hin * Win), np.float32)
    for kh in range(3):
        for kw in range(3):
            k = kh * 3 + kw
            for i in range(Ho):
                for j in range(Wo):
                    r = stride * i + kh - pad
                    c = stride * j + kw - pad
                    if 0 <= r < Hin and 0 <= c < Win:
                        S[k, i * Wo + j, r * Win + c] = 1.0
    return S


# --------------------------- parameter preparation --------------------------- #
def prepare_params(params):
    """One-time fold of conv geometry + weights into dense per-layer matrices.

    Activation layouts (flattened, position-major / channel-minor):
      a1[m1], m1 = p1*8  + c1   (p1 in 8x8 grid)
      a2[m2], m2 = p2*16 + c2   (p2 in 4x4 grid)
      a3[c3]                    (1x1 spatial -> identical to Flatten output)
    """
    w1 = np.asarray(params["w1"], np.float32)   # [8, 1, 3, 3]
    w2 = np.asarray(params["w2"], np.float32)   # [16, 8, 3, 3]
    w3 = np.asarray(params["w3"], np.float32)   # [32, 16, 3, 3]
    b1 = np.asarray(params["b1"], np.float32)
    b2 = np.asarray(params["b2"], np.float32)
    b3 = np.asarray(params["b3"], np.float32)

    # -> [9, Cin, Cout] with k = kh*3 + kw
    w1k = w1.transpose(2, 3, 1, 0).reshape(9, 1, 8)
    w2k = w2.transpose(2, 3, 1, 0).reshape(9, 8, 16)
    w3k = w3.transpose(2, 3, 1, 0).reshape(9, 16, 32)

    S1 = _gather_mats(*_CONV_GEOM[0])           # [9, 64, 256]
    S2 = _gather_mats(*_CONV_GEOM[1])           # [9, 16, 64]
    S3 = _gather_mats(*_CONV_GEOM[2])           # [9, 1, 16]

    # conv1 folded: W1f[q, p1*8 + c1]  = sum_k S1[k,p1,q] * w1k[k,0,c1]
    W1f = np.einsum("kpq,kc->qpc", S1, w1k[:, 0, :]).reshape(256, 64 * 8)
    # conv2 folded: W2f[p1*8+c1, p2*16+c2] = sum_k S2[k,p2,p1] * w2k[k,c1,c2]
    W2f = np.einsum("kPQ,kcd->QcPd", S2, w2k).reshape(64 * 8, 16 * 16)
    # conv3 folded: W3f[p2*16+c2, c3]      = sum_k S3[k,0,p2]  * w3k[k,c2,c3]
    W3f = np.einsum("kPQ,kcd->QcPd", S3, w3k).reshape(16 * 16, 32)

    wl1 = np.asarray(params["wl1"], np.float32).T          # [32, fc2]
    bl1 = np.asarray(params["bl1"], np.float32).reshape(1, -1)
    wl2 = np.asarray(params["wl2"], np.float32).T          # [fc2, E]
    bl2 = np.asarray(params["bl2"], np.float32).reshape(1, -1)

    E = wl2.shape[1]
    Ep = _round_up(max(E, _LANE), _LANE)                    # lane-dense output
    wl2p = np.zeros((wl2.shape[0], Ep), np.float32)
    wl2p[:, :E] = wl2
    bl2p = np.zeros((1, Ep), np.float32)
    bl2p[:, :E] = bl2

    prep = {
        "w1f": jnp.asarray(W1f), "b1f": jnp.asarray(np.tile(b1, 64)[None, :]),
        "w2f": jnp.asarray(W2f), "b2f": jnp.asarray(np.tile(b2, 16)[None, :]),
        "w3f": jnp.asarray(W3f), "b3f": jnp.asarray(b3[None, :]),
        "wl1": jnp.asarray(wl1), "bl1": jnp.asarray(bl1),
        "wl2": jnp.asarray(wl2p), "bl2": jnp.asarray(bl2p),
    }
    return prep, E


# ------------------------------ Pallas kernel ------------------------------ #
def _encoder_kernel(x_ref, w1_ref, b1_ref, w2_ref, b2_ref, w3_ref, b3_ref,
                    wl1_ref, bl1_ref, wl2_ref, bl2_ref, o_ref):
    f32 = jnp.float32
    x = x_ref[...]                                                  # [TB, 256]
    a1 = jnp.maximum(jnp.dot(x, w1_ref[...], preferred_element_type=f32)
                     + b1_ref[...], 0.0)                            # [TB, 512]
    a2 = jnp.maximum(jnp.dot(a1, w2_ref[...], preferred_element_type=f32)
                     + b2_ref[...], 0.0)                            # [TB, 256]
    a3 = jnp.maximum(jnp.dot(a2, w3_ref[...], preferred_element_type=f32)
                     + b3_ref[...], 0.0)                            # [TB, 32]
    z = jnp.maximum(jnp.dot(a3, wl1_ref[...], preferred_element_type=f32)
                    + bl1_ref[...], 0.0)                            # [TB, fc2]
    o = jnp.dot(z, wl2_ref[...], preferred_element_type=f32) + bl2_ref[...]
    o_ref[...] = o.astype(o_ref.dtype)                              # [TB, 128]


# ------------------------------ wrapper (JAX) ------------------------------ #
@functools.partial(jax.jit, static_argnames=("e_dim",))
def encoder_forward(x, prep, e_dim):
    """x: [B, 1, 16, 16] (NCHW, like the PyTorch module) -> [B, e_dim]."""
    B = x.shape[0]
    HW = x.shape[2] * x.shape[3]
    x_flat = x.reshape(B, HW)                    # Cin == 1 -> pure relayout

    TB = _TB_MAX if B >= _TB_MAX else _round_up(max(B, 8), 8)
    Bp = _round_up(B, TB)
    if Bp != B:
        x_flat = jnp.pad(x_flat, ((0, Bp - B), (0, 0)))
    n_tiles = Bp // TB

    order = ("w1f", "b1f", "w2f", "b2f", "w3f", "b3f",
             "wl1", "bl1", "wl2", "bl2")
    consts = [prep[k] for k in order]
    Ep = prep["bl2"].shape[1]
    fc2 = prep["bl1"].shape[1]

    def const_spec(a):
        # Constant block index every grid step -> not re-DMA'd.
        return pl.BlockSpec(a.shape, lambda t, _nd=a.ndim: (0,) * _nd)

    flops = 2 * Bp * (HW * 512 + 512 * 256 + 256 * 32 + 32 * fc2 + fc2 * Ep)
    bytes_accessed = 4 * (Bp * HW + Bp * Ep
                          + sum(int(np.prod(a.shape)) for a in consts))

    out = pl.pallas_call(
        _encoder_kernel,
        out_shape=jax.ShapeDtypeStruct((Bp, Ep), jnp.float32),
        grid_spec=pltpu.PrefetchScalarGridSpec(
            num_scalar_prefetch=0,
            grid=(n_tiles,),
            in_specs=[pl.BlockSpec((TB, HW), lambda t: (t, 0))]
                     + [const_spec(a) for a in consts],
            out_specs=pl.BlockSpec((TB, Ep), lambda t: (t, 0)),
        ),
        compiler_params=pltpu.CompilerParams(
            dimension_semantics=("parallel",)),
        cost_estimate=pl.CostEstimate(flops=flops, transcendentals=0,
                                      bytes_accessed=bytes_accessed),
    )(x_flat, *consts)
    return out[:B, :e_dim]


# --------------------------- pure-JAX reference ----------------------------- #
def encoder_ref(x, params):
    def conv(x, w, b, stride, pad):
        y = lax.conv_general_dilated(
            x, w, (stride, stride), [(pad, pad), (pad, pad)],
            dimension_numbers=("NCHW", "OIHW", "NCHW"))
        return jax.nn.relu(y + b.reshape(1, -1, 1, 1))

    x = conv(x, params["w1"], params["b1"], 2, 1)
    x = conv(x, params["w2"], params["b2"], 2, 1)
    x = conv(x, params["w3"], params["b3"], 2, 0)
    x = x.reshape(x.shape[0], -1)
    x = jax.nn.relu(x @ params["wl1"].T + params["bl1"])
    x = x @ params["wl2"].T + params["bl2"]
    return x


# ---------------------------------- main ------------------------------------ #
def init_params(key, fc2_input_dim, encoded_space_dim):
    ks = jax.random.split(key, 10)

    def w(k, shape, fan_in):
        return jax.random.normal(k, shape, jnp.float32) / np.sqrt(fan_in)

    return {
        "w1": w(ks[0], (8, 1, 3, 3), 1 * 9),
        "b1": w(ks[1], (8,), 1 * 9),
        "w2": w(ks[2], (16, 8, 3, 3), 8 * 9),
        "b2": w(ks[3], (16,), 8 * 9),
        "w3": w(ks[4], (32, 16, 3, 3), 16 * 9),
        "b3": w(ks[5], (32,), 16 * 9),
        "wl1": w(ks[6], (fc2_input_dim, 32), 32),
        "bl1": w(ks[7], (fc2_input_dim,), 32),
        "wl2": w(ks[8], (encoded_space_dim, fc2_input_dim), fc2_input_dim),
        "bl2": w(ks[9], (encoded_space_dim,), fc2_input_dim),
    }


if __name__ == "__main__":
    fc2_input_dim = 32
    encoded_space_dim = 8
    key = jax.random.PRNGKey(0)
    k_in, k_in2, k_p = jax.random.split(key, 3)

    params = init_params(k_p, fc2_input_dim, encoded_space_dim)
    prep, e_dim = prepare_params(params)          # one-time weight fold/relayout

    # Small-batch check (B=2, single tile, padded to the 8-sublane minimum).
    x = jax.random.normal(k_in, (2, 1, 16, 16), jnp.float32)
    out = jax.block_until_ready(encoder_forward(x, prep, e_dim))
    ref = jax.block_until_ready(encoder_ref(x, params))
    assert out.shape == (2, encoded_space_dim), out.shape
    np.testing.assert_allclose(np.asarray(out), np.asarray(ref),
                               rtol=2e-4, atol=2e-4)

    # Larger, non-multiple batch exercises the multi-tile + padding path.
    x2 = jax.random.normal(k_in2, (300, 1, 16, 16), jnp.float32)
    out2 = jax.block_until_ready(encoder_forward(x2, prep, e_dim))
    ref2 = jax.block_until_ready(encoder_ref(x2, params))
    assert out2.shape == (300, encoded_space_dim), out2.shape
    np.testing.assert_allclose(np.asarray(out2), np.asarray(ref2),
                               rtol=2e-4, atol=2e-4)

    print("KERNEL_OK")
</pallas_src>

<mosaic_0001>
module attributes {stable_mosaic.version = 11 : i64} {
  func.func @_encoder_kernel(%arg0: i32, %arg1: memref<8x256xf32, #tpu.memory_space<vmem>>, %arg2: memref<256x512xf32, #tpu.memory_space<vmem>>, %arg3: memref<1x512xf32, #tpu.memory_space<vmem>>, %arg4: memref<512x256xf32, #tpu.memory_space<vmem>>, %arg5: memref<1x256xf32, #tpu.memory_space<vmem>>, %arg6: memref<256x32xf32, #tpu.memory_space<vmem>>, %arg7: memref<1x32xf32, #tpu.memory_space<vmem>>, %arg8: memref<32x32xf32, #tpu.memory_space<vmem>>, %arg9: memref<1x32xf32, #tpu.memory_space<vmem>>, %arg10: memref<32x128xf32, #tpu.memory_space<vmem>>, %arg11: memref<1x128xf32, #tpu.memory_space<vmem>>, %arg12: memref<8x128xf32, #tpu.memory_space<vmem>>) attributes {dimension_semantics = [#tpu.dimension_semantics<parallel>], iteration_bounds = array<i64: 1>, scalar_prefetch = 0 : i64, scratch_operands = 0 : i64, tpu.core_type = #tpu.core_type<tc>, window_params = [{transform_indices = @transform_0, window_bounds = array<i64: 8, 256>}, {pipeline_mode = #tpu.pipeline_mode<synchronous>, transform_indices = @transform_1, window_bounds = array<i64: 256, 512>}, {pipeline_mode = #tpu.pipeline_mode<synchronous>, transform_indices = @transform_2, window_bounds = array<i64: 1, 512>}, {pipeline_mode = #tpu.pipeline_mode<synchronous>, transform_indices = @transform_3, window_bounds = array<i64: 512, 256>}, {pipeline_mode = #tpu.pipeline_mode<synchronous>, transform_indices = @transform_4, window_bounds = array<i64: 1, 256>}, {pipeline_mode = #tpu.pipeline_mode<synchronous>, transform_indices = @transform_5, window_bounds = array<i64: 256, 32>}, {pipeline_mode = #tpu.pipeline_mode<synchronous>, transform_indices = @transform_6, window_bounds = array<i64: 1, 32>}, {pipeline_mode = #tpu.pipeline_mode<synchronous>, transform_indices = @transform_7, window_bounds = array<i64: 32, 32>}, {pipeline_mode = #tpu.pipeline_mode<synchronous>, transform_indices = @transform_8, window_bounds = array<i64: 1, 32>}, {pipeline_mode = #tpu.pipeline_mode<synchronous>, transform_indices = @transform_9, window_bounds = array<i64: 32, 128>}, {pipeline_mode = #tpu.pipeline_mode<synchronous>, transform_indices = @transform_10, window_bounds = array<i64: 1, 128>}, {transform_indices = @transform_11, window_bounds = array<i64: 8, 128>}]} {
    %c0 = arith.constant 0 : index
    %c0_0 = arith.constant 0 : index
    %0 = vector.load %arg1[%c0, %c0_0] : memref<8x256xf32, #tpu.memory_space<vmem>>, vector<8x256xf32>
    %c0_1 = arith.constant 0 : index
    %c0_2 = arith.constant 0 : index
    %1 = vector.load %arg2[%c0_1, %c0_2] : memref<256x512xf32, #tpu.memory_space<vmem>>, vector<256x512xf32>
    %cst = arith.constant dense<0.000000e+00> : vector<8x512xf32>
    %2 = tpu.matmul %0, %1, %cst {dimension_numbers = #tpu.dot_dimension_numbers<[1], [0], [0], [1], [0, 0, 1, 1], [], []>} : vector<8x256xf32>, vector<256x512xf32>, vector<8x512xf32> -> vector<8x512xf32>
    %c0_3 = arith.constant 0 : index
    %c0_4 = arith.constant 0 : index
    %3 = vector.load %arg3[%c0_3, %c0_4] : memref<1x512xf32, #tpu.memory_space<vmem>>, vector<1x512xf32>
    %4 = vector.broadcast %3 : vector<1x512xf32> to vector<8x512xf32>
    %5 = arith.addf %2, %4 : vector<8x512xf32>
    %cst_5 = arith.constant 0.000000e+00 : f32
    %6 = vector.broadcast %cst_5 : f32 to vector<8x512xf32>
    %7 = arith.maximumf %5, %6 : vector<8x512xf32>
    %c0_6 = arith.constant 0 : index
    %c0_7 = arith.constant 0 : index
    %8 = vector.load %arg4[%c0_6, %c0_7] : memref<512x256xf32, #tpu.memory_space<vmem>>, vector<512x256xf32>
    %cst_8 = arith.constant dense<0.000000e+00> : vector<8x256xf32>
    %9 = tpu.matmul %7, %8, %cst_8 {dimension_numbers = #tpu.dot_dimension_numbers<[1], [0], [0], [1], [0, 0, 1, 1], [], []>} : vector<8x512xf32>, vector<512x256xf32>, vector<8x256xf32> -> vector<8x256xf32>
    %c0_9 = arith.constant 0 : index
    %c0_10 = arith.constant 0 : index
    %10 = vector.load %arg5[%c0_9, %c0_10] : memref<1x256xf32, #tpu.memory_space<vmem>>, vector<1x256xf32>
    %11 = vector.broadcast %10 : vector<1x256xf32> to vector<8x256xf32>
    %12 = arith.addf %9, %11 : vector<8x256xf32>
    %cst_11 = arith.constant 0.000000e+00 : f32
    %13 = vector.broadcast %cst_11 : f32 to vector<8x256xf32>
    %14 = arith.maximumf %12, %13 : vector<8x256xf32>
    %c0_12 = arith.constant 0 : index
    %c0_13 = arith.constant 0 : index
    %15 = vector.load %arg6[%c0_12, %c0_13] : memref<256x32xf32, #tpu.memory_space<vmem>>, vector<256x32xf32>
    %cst_14 = arith.constant dense<0.000000e+00> : vector<8x32xf32>
    %16 = tpu.matmul %14, %15, %cst_14 {dimension_numbers = #tpu.dot_dimension_numbers<[1], [0], [0], [1], [0, 0, 1, 1], [], []>} : vector<8x256xf32>, vector<256x32xf32>, vector<8x32xf32> -> vector<8x32xf32>
    %c0_15 = arith.constant 0 : index
    %c0_16 = arith.constant 0 : index
    %17 = vector.load %arg7[%c0_15, %c0_16] : memref<1x32xf32, #tpu.memory_space<vmem>>, vector<1x32xf32>
    %18 = vector.broadcast %17 : vector<1x32xf32> to vector<8x32xf32>
    %19 = arith.addf %16, %18 : vector<8x32xf32>
    %cst_17 = arith.constant 0.000000e+00 : f32
    %20 = vector.broadcast %cst_17 : f32 to vector<8x32xf32>
    %21 = arith.maximumf %19, %20 : vector<8x32xf32>
    %c0_18 = arith.constant 0 : index
    %c0_19 = arith.constant 0 : index
    %22 = vector.load %arg8[%c0_18, %c0_19] : memref<32x32xf32, #tpu.memory_space<vmem>>, vector<32x32xf32>
    %cst_20 = arith.constant dense<0.000000e+00> : vector<8x32xf32>
    %23 = tpu.matmul %21, %22, %cst_20 {dimension_numbers = #tpu.dot_dimension_numbers<[1], [0], [0], [1], [0, 0, 1, 1], [], []>} : vector<8x32xf32>, vector<32x32xf32>, vector<8x32xf32> -> vector<8x32xf32>
    %c0_21 = arith.constant 0 : index
    %c0_22 = arith.constant 0 : index
    %24 = vector.load %arg9[%c0_21, %c0_22] : memref<1x32xf32, #tpu.memory_space<vmem>>, vector<1x32xf32>
    %25 = vector.broadcast %24 : vector<1x32xf32> to vector<8x32xf32>
    %26 = arith.addf %23, %25 : vector<8x32xf32>
    %cst_23 = arith.constant 0.000000e+00 : f32
    %27 = vector.broadcast %cst_23 : f32 to vector<8x32xf32>
    %28 = arith.maximumf %26, %27 : vector<8x32xf32>
    %c0_24 = arith.constant 0 : index
    %c0_25 = arith.constant 0 : index
    %29 = vector.load %arg10[%c0_24, %c0_25] : memref<32x128xf32, #tpu.memory_space<vmem>>, vector<32x128xf32>
    %cst_26 = arith.constant dense<0.000000e+00> : vector<8x128xf32>
    %30 = tpu.matmul %28, %29, %cst_26 {dimension_numbers = #tpu.dot_dimension_numbers<[1], [0], [0], [1], [0, 0, 1, 1], [], []>} : vector<8x32xf32>, vector<32x128xf32>, vector<8x128xf32> -> vector<8x128xf32>
    %c0_27 = arith.constant 0 : index
    %c0_28 = arith.constant 0 : index
    %31 = vector.load %arg11[%c0_27, %c0_28] : memref<1x128xf32, #tpu.memory_space<vmem>>, vector<1x128xf32>
    %32 = vector.broadcast %31 : vector<1x128xf32> to vector<8x128xf32>
    %33 = arith.addf %30, %32 : vector<8x128xf32>
    %c0_29 = arith.constant 0 : index
    %c0_30 = arith.constant 0 : index
    %34 = vector.load %arg12[%c0_29, %c0_30] : memref<8x128xf32, #tpu.memory_space<vmem>>, vector<8x128xf32>
    tpu.vector_store %arg12[%c0_29, %c0_30], %33 {strides = array<i32>} : memref<8x128xf32, #tpu.memory_space<vmem>>, vector<8x128xf32>,
    return
  }
  func.func @transform_0(%arg0: i32) -> (i32, i32) {
    %c0_i32 = arith.constant 0 : i32
    %c0_i32_0 = arith.constant 0 : i32
    return %arg0, %c0_i32 : i32, i32
  }
  func.func @transform_1(%arg0: i32) -> (i32, i32) {
    %c0_i32 = arith.constant 0 : i32
    %c0_i32_0 = arith.constant 0 : i32
    %c0_i32_1 = arith.constant 0 : i32
    return %c0_i32, %c0_i32_0 : i32, i32
  }
  func.func @transform_2(%arg0: i32) -> (i32, i32) {
    %c0_i32 = arith.constant 0 : i32
    %c0_i32_0 = arith.constant 0 : i32
    %c0_i32_1 = arith.constant 0 : i32
    return %c0_i32, %c0_i32_0 : i32, i32
  }
  func.func @transform_3(%arg0: i32) -> (i32, i32) {
    %c0_i32 = arith.constant 0 : i32
    %c0_i32_0 = arith.constant 0 : i32
    %c0_i32_1 = arith.constant 0 : i32
    return %c0_i32, %c0_i32_0 : i32, i32
  }
  func.func @transform_4(%arg0: i32) -> (i32, i32) {
    %c0_i32 = arith.constant 0 : i32
    %c0_i32_0 = arith.constant 0 : i32
    %c0_i32_1 = arith.constant 0 : i32
    return %c0_i32, %c0_i32_0 : i32, i32
  }
  func.func @transform_5(%arg0: i32) -> (i32, i32) {
    %c0_i32 = arith.constant 0 : i32
    %c0_i32_0 = arith.constant 0 : i32
    %c0_i32_1 = arith.constant 0 : i32
    return %c0_i32, %c0_i32_0 : i32, i32
  }
  func.func @transform_6(%arg0: i32) -> (i32, i32) {
    %c0_i32 = arith.constant 0 : i32
    %c0_i32_0 = arith.constant 0 : i32
    %c0_i32_1 = arith.constant 0 : i32
    return %c0_i32, %c0_i32_0 : i32, i32
  }
  func.func @transform_7(%arg0: i32) -> (i32, i32) {
    %c0_i32 = arith.constant 0 : i32
    %c0_i32_0 = arith.constant 0 : i32
    %c0_i32_1 = arith.constant 0 : i32
    return %c0_i32, %c0_i32_0 : i32, i32
  }
  func.func @transform_8(%arg0: i32) -> (i32, i32) {
    %c0_i32 = arith.constant 0 : i32
    %c0_i32_0 = arith.constant 0 : i32
    %c0_i32_1 = arith.constant 0 : i32
    return %c0_i32, %c0_i32_0 : i32, i32
  }
  func.func @transform_9(%arg0: i32) -> (i32, i32) {
    %c0_i32 = arith.constant 0 : i32
    %c0_i32_0 = arith.constant 0 : i32
    %c0_i32_1 = arith.constant 0 : i32
    return %c0_i32, %c0_i32_0 : i32, i32
  }
  func.func @transform_10(%arg0: i32) -> (i32, i32) {
    %c0_i32 = arith.constant 0 : i32
    %c0_i32_0 = arith.constant 0 : i32
    %c0_i32_1 = arith.constant 0 : i32
    return %c0_i32, %c0_i32_0 : i32, i32
  }
  func.func @transform_11(%arg0: i32) -> (i32, i32) {
    %c0_i32 = arith.constant 0 : i32
    %c0_i32_0 = arith.constant 0 : i32
    return %arg0, %c0_i32 : i32, i32
  }
}

</mosaic_0001>

<llo_original>
// kernel: encoder_forward.1
$region0: #{encoder_forward.1}
  #allocation0 [shape = 'u32[]', space=smem, size = 0x4, offset = 0x4, fixed_abs, tag = 'smem constant byte address 0x4 - core index']
  #allocation1 [shape = 'u32[144,128]{1,0:T(1,128)}', space=vmem, size = 0x12000, scoped, tag = 'internal scratch']
  %s0 = inlined_call_operand.vmem [shape: f32[8,256], index: 0, kind: input, shape index: {}]
  %s1 = inlined_call_operand.hbm [shape: f32[256,512], index: 1, kind: input, shape index: {}]
  %s2 = inlined_call_operand.vmem [shape: f32[1,512], index: 2, kind: input, shape index: {}]
  %s3 = inlined_call_operand.hbm [shape: f32[512,256], index: 3, kind: input, shape index: {}]
  %s4 = inlined_call_operand.vmem [shape: f32[1,256], index: 4, kind: input, shape index: {}]
  %s5 = inlined_call_operand.vmem [shape: f32[256,32], index: 5, kind: input, shape index: {}]
  %s6 = inlined_call_operand.vmem [shape: f32[1,32], index: 6, kind: input, shape index: {}]
  %s7 = inlined_call_operand.vmem [shape: f32[32,32], index: 7, kind: input, shape index: {}]
  %s8 = inlined_call_operand.vmem [shape: f32[1,32], index: 8, kind: input, shape index: {}]
  %s9 = inlined_call_operand.vmem [shape: f32[32,128], index: 9, kind: input, shape index: {}]
  %s10 = inlined_call_operand.vmem [shape: f32[1,128], index: 10, kind: input, shape index: {}]
  %s11 = inlined_call_operand.vmem [shape: f32[8,128], index: 11, kind: output, shape index: {}]
  %s12 = sld [smem:[#allocation0]]
  $region62: #{encoder_forward.1} parent=0
    _
  %s14 = ssub.s32 1, %s12
  %s15 = scalar_select 0, %s14, %s12
  $region1: #{encoder_forward.1} parent=0
    #allocation2 [shape = 'u8[524288]{0}', space=vmem, size = 0x80000, scoped, tag = 'input window, operand 1, single buffered']
    #allocation3 [shape = 's32[1]{0}', space=sflag, size = 0x4, scoped, tag = 'scoped memory for encoder_forward.1']
    #allocation4 [shape = 'u8[524288]{0}', space=vmem, size = 0x80000, scoped, tag = 'input window, operand 3, single buffered']
    #allocation5 [shape = 's32[1]{0}', space=sflag, size = 0x4, scoped, tag = 'scoped memory for encoder_forward.1']
    %16 = vsyncpa [#allocation3], 0
    %17 = vsyncpa [#allocation5], 0
    // Predicated region
    $region2: #{encoder_forward.1} parent=1 // pred_check
      _
    $region3: #{encoder_forward.1} parent=1 // pred_check_branch
      %19 = sbr.rel (0) target = $region5
    $region4: #{encoder_forward.1} parent=1 // pred_region
      _
    $region5: #{encoder_forward.1} parent=1 // pred_fallthru
      _
    // Predicated region
    $region6: #{encoder_forward.1} parent=1 // pred_check
      _
    $region7: #{encoder_forward.1} parent=1 // pred_check_branch
      %21 = sbr.rel (0) target = $region9
    $region8: #{encoder_forward.1} parent=1 // pred_region
      %s23 = ssub.s32 16384, 16384
      %24 = vsyncadd [#allocation3], %s23
      %s25 = sshll.u32 [#allocation2], 4
      %s26 = int_to_ptr.vmem [resolvable:$true] %s25
      %31 = dma.hbm_to_vmem [thread:$0]  %s1, 16384, %s26, [#allocation3], 512, 512, 32
    $region9: #{encoder_forward.1} parent=1 // pred_fallthru
      _
    // Predicated region
    $region10: #{encoder_forward.1} parent=1 // pred_check
      _
    $region11: #{encoder_forward.1} parent=1 // pred_check_branch
      %33 = sbr.rel (0) target = $region13
    $region12: #{encoder_forward.1} parent=1 // pred_region
      _
    $region13: #{encoder_forward.1} parent=1 // pred_fallthru
      _
    // Predicated region
    $region14: #{encoder_forward.1} parent=1 // pred_check
      _
    $region15: #{encoder_forward.1} parent=1 // pred_check_branch
      %35 = sbr.rel (0) target = $region17
    $region16: #{encoder_forward.1} parent=1 // pred_region
      %s37 = ssub.s32 16384, 16384
      %38 = vsyncadd [#allocation5], %s37
      %s39 = sshll.u32 [#allocation4], 4
      %s40 = int_to_ptr.vmem [resolvable:$true] %s39
      %45 = dma.hbm_to_vmem [thread:$0]  %s3, 16384, %s40, [#allocation5], 256, 256, 16
    $region17: #{encoder_forward.1} parent=1 // pred_fallthru
      _
    // Predicated region
    $region18: #{encoder_forward.1} parent=1 // pred_check
      _
    $region19: #{encoder_forward.1} parent=1 // pred_check_branch
      %47 = sbr.rel (0) target = $region21
    $region20: #{encoder_forward.1} parent=1 // pred_region
      _
    $region21: #{encoder_forward.1} parent=1 // pred_fallthru
      _
    // Predicated region
    $region22: #{encoder_forward.1} parent=1 // pred_check
      _
    $region23: #{encoder_forward.1} parent=1 // pred_check_branch
      %49 = sbr.rel (0) target = $region25
    $region24: #{encoder_forward.1} parent=1 // pred_region
      _
    $region25: #{encoder_forward.1} parent=1 // pred_fallthru
      _
    // Predicated region
    $region26: #{encoder_forward.1} parent=1 // pred_check
      _
    $region27: #{encoder_forward.1} parent=1 // pred_check_branch
      %51 = sbr.rel (0) target = $region29
    $region28: #{encoder_forward.1} parent=1 // pred_region
      _
    $region29: #{encoder_forward.1} parent=1 // pred_fallthru
      _
    // Predicated region
    $region30: #{encoder_forward.1} parent=1 // pred_check
      _
    $region31: #{encoder_forward.1} parent=1 // pred_check_branch
      %53 = sbr.rel (0) target = $region33
    $region32: #{encoder_forward.1} parent=1 // pred_region
      _
    $region33: #{encoder_forward.1} parent=1 // pred_fallthru
      _
    // Predicated region
    $region34: #{encoder_forward.1} parent=1 // pred_check
      _
    $region35: #{encoder_forward.1} parent=1 // pred_check_branch
      %55 = sbr.rel (0) target = $region37
    $region36: #{encoder_forward.1} parent=1 // pred_region
      _
    $region37: #{encoder_forward.1} parent=1 // pred_fallthru
      _
    // Predicated region
    $region38: #{encoder_forward.1} parent=1 // pred_check
      _
    $region39: #{encoder_forward.1} parent=1 // pred_check_branch
      %57 = sbr.rel (0) target = $region41
    $region40: #{encoder_forward.1} parent=1 // pred_region
      _
    $region41: #{encoder_forward.1} parent=1 // pred_fallthru
      _
    // Predicated region
    $region42: #{encoder_forward.1} parent=1 // pred_check
      _
    $region43: #{encoder_forward.1} parent=1 // pred_check_branch
      %59 = sbr.rel (0) target = $region45
    $region44: #{encoder_forward.1} parent=1 // pred_region
      _
    $region45: #{encoder_forward.1} parent=1 // pred_fallthru
      _
    // Predicated region
    $region46: #{encoder_forward.1} parent=1 // pred_check
      _
    $region47: #{encoder_forward.1} parent=1 // pred_check_branch
      %61 = sbr.rel (0) target = $region49
    $region48: #{encoder_forward.1} parent=1 // pred_region
      %62 = dma.done [#allocation3], 16384
    $region49: #{encoder_forward.1} parent=1 // pred_fallthru
      _
    // Predicated region
    $region50: #{encoder_forward.1} parent=1 // pred_check
      _
    $region51: #{encoder_forward.1} parent=1 // pred_check_branch
      %64 = sbr.rel (0) target = $region53
    $region52: #{encoder_forward.1} parent=1 // pred_region
      %65 = dma.done [#allocation5], 16384
    $region53: #{encoder_forward.1} parent=1 // pred_fallthru
      _
    %v66 = vld [vmem:[%s0] sm:$0xff]
    %v67 = vld [vmem:[%s0 + $0x8] sm:$0xff]
    %v68 = vld [vmem:[#allocation2] sm:$0xff]
    %v69 = vld [vmem:[#allocation2 + $0x8] sm:$0xff]
    %v70 = vld [vmem:[#allocation2 + $0x10] sm:$0xff]
    %v71 = vld [vmem:[#allocation2 + $0x18] sm:$0xff]
    %v72 = vld [vmem:[#allocation2 + $0x20] sm:$0xff]
    %v73 = vld [vmem:[#allocation2 + $0x28] sm:$0xff]
    %v74 = vld [vmem:[#allocation2 + $0x30] sm:$0xff]
    %v75 = vld [vmem:[#allocation2 + $0x38] sm:$0xff]
    %v76 = vld [vmem:[#allocation2 + $0x40] sm:$0xff]
    %v77 = vld [vmem:[#allocation2 + $0x48] sm:$0xff]
    %v78 = vld [vmem:[#allocation2 + $0x50] sm:$0xff]
    %v79 = vld [vmem:[#allocation2 + $0x58] sm:$0xff]
    %v80 = vld [vmem:[#allocation2 + $0x60] sm:$0xff]
    %v81 = vld [vmem:[#allocation2 + $0x68] sm:$0xff]
    %v82 = vld [vmem:[#allocation2 + $0x70] sm:$0xff]
    %v83 = vld [vmem:[#allocation2 + $0x78] sm:$0xff]
    %v84 = vld [vmem:[#allocation2 + $0x80] sm:$0xff]
    %v85 = vld [vmem:[#allocation2 + $0x88] sm:$0xff]
    %v86 = vld [vmem:[#allocation2 + $0x90] sm:$0xff]
    %v87 = vld [vmem:[#allocation2 + $0x98] sm:$0xff]
    %v88 = vld [vmem:[#allocation2 + $0xa0] sm:$0xff]
    %v89 = vld [vmem:[#allocation2 + $0xa8] sm:$0xff]
    %v90 = vld [vmem:[#allocation2 + $0xb0] sm:$0xff]
    %v91 = vld [vmem:[#allocation2 + $0xb8] sm:$0xff]
    %v92 = vld [vmem:[#allocation2 + $0xc0] sm:$0xff]
    %v93 = vld [vmem:[#allocation2 + $0xc8] sm:$0xff]
    %v94 = vld [vmem:[#allocation2 + $0xd0] sm:$0xff]
    %v95 = vld [vmem:[#allocation2 + $0xd8] sm:$0xff]
    %v96 = vld [vmem:[#allocation2 + $0xe0] sm:$0xff]
    %v97 = vld [vmem:[#allocation2 + $0xe8] sm:$0xff]
    %v98 = vld [vmem:[#allocation2 + $0xf0] sm:$0xff]
    %v99 = vld [vmem:[#allocation2 + $0xf8] sm:$0xff]
    %v100 = vld [vmem:[#allocation2 + $0x100] sm:$0xff]
    %v101 = vld [vmem:[#allocation2 + $0x108] sm:$0xff]
    %v102 = vld [vmem:[#allocation2 + $0x110] sm:$0xff]
    %v103 = vld [vmem:[#allocation2 + $0x118] sm:$0xff]
    %v104 = vld [vmem:[#allocation2 + $0x120] sm:$0xff]
    %v105 = vld [vmem:[#allocation2 + $0x128] sm:$0xff]
    %v106 = vld [vmem:[#allocation2 + $0x130] sm:$0xff]
    %v107 = vld [vmem:[#allocation2 + $0x138] sm:$0xff]
    %v108 = vld [vmem:[#allocation2 + $0x140] sm:$0xff]
    %v109 = vld [vmem:[#allocation2 + $0x148] sm:$0xff]
    %v110 = vld [vmem:[#allocation2 + $0x150] sm:$0xff]
    %v111 = vld [vmem:[#allocation2 + $0x158] sm:$0xff]
    %v112 = vld [vmem:[#allocation2 + $0x160] sm:$0xff]
    %v113 = vld [vmem:[#allocation2 + $0x168] sm:$0xff]
    %v114 = vld [vmem:[#allocation2 + $0x170] sm:$0xff]
    %v115 = vld [vmem:[#allocation2 + $0x178] sm:$0xff]
    %v116 = vld [vmem:[#allocation2 + $0x180] sm:$0xff]
    %v117 = vld [vmem:[#allocation2 + $0x188] sm:$0xff]
    %v118 = vld [vmem:[#allocation2 + $0x190] sm:$0xff]
    %v119 = vld [vmem:[#allocation2 + $0x198] sm:$0xff]
    %v120 = vld [vmem:[#allocation2 + $0x1a0] sm:$0xff]
    %v121 = vld [vmem:[#allocation2 + $0x1a8] sm:$0xff]
    %v122 = vld [vmem:[#allocation2 + $0x1b0] sm:$0xff]
    %v123 = vld [vmem:[#allocation2 + $0x1b8] sm:$0xff]
    %v124 = vld [vmem:[#allocation2 + $0x1c0] sm:$0xff]
    %v125 = vld [vmem:[#allocation2 + $0x1c8] sm:$0xff]
    %v126 = vld [vmem:[#allocation2 + $0x1d0] sm:$0xff]
    %v127 = vld [vmem:[#allocation2 + $0x1d8] sm:$0xff]
    %v128 = vld [vmem:[#allocation2 + $0x1e0] sm:$0xff]
    %v129 = vld [vmem:[#allocation2 + $0x1e8] sm:$0xff]
    %v130 = vld [vmem:[#allocation2 + $0x1f0] sm:$0xff]
    %v131 = vld [vmem:[#allocation2 + $0x1f8] sm:$0xff]
    %v132 = vld [vmem:[#allocation2 + $0x200] sm:$0xff]
    %v133 = vld [vmem:[#allocation2 + $0x208] sm:$0xff]
    %v134 = vld [vmem:[#allocation2 + $0x210] sm:$0xff]
    %v135 = vld [vmem:[#allocation2 + $0x218] sm:$0xff]
    %v136 = vld [vmem:[#allocation2 + $0x220] sm:$0xff]
    %v137 = vld [vmem:[#allocation2 + $0x228] sm:$0xff]
    %v138 = vld [vmem:[#allocation2 + $0x230] sm:$0xff]
    %v139 = vld [vmem:[#allocation2 + $0x238] sm:$0xff]
    %v140 = vld [vmem:[#allocation2 + $0x240] sm:$0xff]
    %v141 = vld [vmem:[#allocation2 + $0x248] sm:$0xff]
    %v142 = vld [vmem:[#allocation2 + $0x250] sm:$0xff]
    %v143 = vld [vmem:[#allocation2 + $0x258] sm:$0xff]
    %v144 = vld [vmem:[#allocation2 + $0x260] sm:$0xff]
    %v145 = vld [vmem:[#allocation2 + $0x268] sm:$0xff]
    %v146 = vld [vmem:[#allocation2 + $0x270] sm:$0xff]
    %v147 = vld [vmem:[#allocation2 + $0x278] sm:$0xff]
    %v148 = vld [vmem:[#allocation2 + $0x280] sm:$0xff]
    %v149 = vld [vmem:[#allocation2 + $0x288] sm:$0xff]
    %v150 = vld [vmem:[#allocation2 + $0x290] sm:$0xff]
    %v151 = vld [vmem:[#allocation2 + $0x298] sm:$0xff]
    %v152 = vld [vmem:[#allocation2 + $0x2a0] sm:$0xff]
    %v153 = vld [vmem:[#allocation2 + $0x2a8] sm:$0xff]
    %v154 = vld [vmem:[#allocation2 + $0x2b0] sm:$0xff]
    %v155 = vld [vmem:[#allocation2 + $0x2b8] sm:$0xff]
    %v156 = vld [vmem:[#allocation2 + $0x2c0] sm:$0xff]
    %v157 = vld [vmem:[#allocation2 + $0x2c8] sm:$0xff]
    %v158 = vld [vmem:[#allocation2 + $0x2d0] sm:$0xff]
    %v159 = vld [vmem:[#allocation2 + $0x2d8] sm:$0xff]
    %v160 = vld [vmem:[#allocation2 + $0x2e0] sm:$0xff]
    %v161 = vld [vmem:[#allocation2 + $0x2e8] sm:$0xff]
    %v162 = vld [vmem:[#allocation2 + $0x2f0] sm:$0xff]
    %v163 = vld [vmem:[#allocation2 + $0x2f8] sm:$0xff]
    %v164 = vld [vmem:[#allocation2 + $0x300] sm:$0xff]
    %v165 = vld [vmem:[#allocation2 + $0x308] sm:$0xff]
    %v166 = vld [vmem:[#allocation2 + $0x310] sm:$0xff]
    %v167 = vld [vmem:[#allocation2 + $0x318] sm:$0xff]
    %v168 = vld [vmem:[#allocation2 + $0x320] sm:$0xff]
    %v169 = vld [vmem:[#allocation2 + $0x328] sm:$0xff]
    %v170 = vld [vmem:[#allocation2 + $0x330] sm:$0xff]
    %v171 = vld [vmem:[#allocation2 + $0x338] sm:$0xff]
    %v172 = vld [vmem:[#allocation2 + $0x340] sm:$0xff]
    %v173 = vld [vmem:[#allocation2 + $0x348] sm:$0xff]
    %v174 = vld [vmem:[#allocation2 + $0x350] sm:$0xff]
    %v175 = vld [vmem:[#allocation2 + $0x358] sm:$0xff]
    %v176 = vld [vmem:[#allocation2 + $0x360] sm:$0xff]
    %v177 = vld [vmem:[#allocation2 + $0x368] sm:$0xff]
    %v178 = vld [vmem:[#allocation2 + $0x370] sm:$0xff]
    %v179 = vld [vmem:[#allocation2 + $0x378] sm:$0xff]
    %v180 = vld [vmem:[#allocation2 + $0x380] sm:$0xff]
    %v181 = vld [vmem:[#allocation2 + $0x388] sm:$0xff]
    %v182 = vld [vmem:[#allocation2 + $0x390] sm:$0xff]
    %v183 = vld [vmem:[#allocation2 + $0x398] sm:$0xff]
    %v184 = vld [vmem:[#allocation2 + $0x3a0] sm:$0xff]
    %v185 = vld [vmem:[#allocation2 + $0x3a8] sm:$0xff]
    %v186 = vld [vmem:[#allocation2 + $0x3b0] sm:$0xff]
    %v187 = vld [vmem:[#allocation2 + $0x3b8] sm:$0xff]
    %v188 = vld [vmem:[#allocation2 + $0x3c0] sm:$0xff]
    %v189 = vld [vmem:[#allocation2 + $0x3c8] sm:$0xff]
    %v190 = vld [vmem:[#allocation2 + $0x3d0] sm:$0xff]
    %v191 = vld [vmem:[#allocation2 + $0x3d8] sm:$0xff]
    %v192 = vld [vmem:[#allocation2 + $0x3e0] sm:$0xff]
    %v193 = vld [vmem:[#allocation2 + $0x3e8] sm:$0xff]
    %v194 = vld [vmem:[#allocation2 + $0x3f0] sm:$0xff]
    %v195 = vld [vmem:[#allocation2 + $0x3f8] sm:$0xff]
    %v196 = vld [vmem:[%s2] sm:$0xf]
    %v198 = vlaneseq
    %v199 = vshrl.u32 %v198, 7
    %v200 = vsub.s32 0, %v199
    %v201 = vrot.slane %v196, %v200
    %v202 = vlaneseq
    %v203 = vshrl.u32 %v202, 7
    %v204 = vsub.s32 1, %v203
    %v205 = vrot.slane %v196, %v204
    %v206 = vlaneseq
    %v207 = vshrl.u32 %v206, 7
    %v208 = vsub.s32 2, %v207
    %v209 = vrot.slane %v196, %v208
    %v210 = vlaneseq
    %v211 = vshrl.u32 %v210, 7
    %v212 = vsub.s32 3, %v211
    %v213 = vrot.slane %v196, %v212
    %218 = vmatprep.subr.mxu0 %v69
    %219 = vmatpush1.msra.mxu0 %v68
    %220 = vmatprep.subr.mxu0 %v73
    %221 = vmatpush1.msra.mxu0 %v72
    %222 = vmatprep.subr.mxu0 %v77
    %223 = vmatpush1.msra.mxu0 %v76
    %224 = vmatprep.subr.mxu0 %v81
    %225 = vmatpush1.msra.mxu0 %v80
    %226 = vmatprep.subr.mxu0 %v85
    %227 = vmatpush1.msra.mxu0 %v84
    %228 = vmatprep.subr.mxu0 %v89
    %229 = vmatpush1.msra.mxu0 %v88
    %230 = vmatprep.subr.mxu0 %v93
    %231 = vmatpush1.msra.mxu0 %v92
    %232 = vmatprep.subr.mxu0 %v97
    %233 = vmatpush1.msra.mxu0 %v96
    %234 = vmatprep.subr.mxu0 %v101
    %235 = vmatpush1.msra.mxu0 %v100
    %236 = vmatprep.subr.mxu0 %v105
    %237 = vmatpush1.msra.mxu0 %v104
    %238 = vmatprep.subr.mxu0 %v109
    %239 = vmatpush1.msra.mxu0 %v108
    %240 = vmatprep.subr.mxu0 %v113
    %241 = vmatpush1.msra.mxu0 %v112
    %242 = vmatprep.subr.mxu0 %v117
    %243 = vmatpush1.msra.mxu0 %v116
    %244 = vmatprep.subr.mxu0 %v121
    %245 = vmatpush1.msra.mxu0 %v120
    %246 = vmatprep.subr.mxu0 %v125
    %247 = vmatpush1.msra.mxu0 %v124
    %248 = vmatprep.subr.mxu0 %v129
    %249 = vmatpush1.msra.mxu0 %v128
    %250 = vmatprep.subr.mxu0 %v133
    %251 = vmatpush1.msra.mxu0 %v132
    %252 = vmatprep.subr.mxu0 %v137
    %253 = vmatpush1.msra.mxu0 %v136
    %254 = vmatprep.subr.mxu0 %v141
    %255 = vmatpush1.msra.mxu0 %v140
    %256 = vmatprep.subr.mxu0 %v145
    %257 = vmatpush1.msra.mxu0 %v144
    %258 = vmatprep.subr.mxu0 %v149
    %259 = vmatpush1.msra.mxu0 %v148
    %260 = vmatprep.subr.mxu0 %v153
    %261 = vmatpush1.msra.mxu0 %v152
    %262 = vmatprep.subr.mxu0 %v157
    %263 = vmatpush1.msra.mxu0 %v156
    %264 = vmatprep.subr.mxu0 %v161
    %265 = vmatpush1.msra.mxu0 %v160
    %266 = vmatprep.subr.mxu0 %v165
    %267 = vmatpush1.msra.mxu0 %v164
    %268 = vmatprep.subr.mxu0 %v169
    %269 = vmatpush1.msra.mxu0 %v168
    %270 = vmatprep.subr.mxu0 %v173
    %271 = vmatpush1.msra.mxu0 %v172
    %272 = vmatprep.subr.mxu0 %v177
    %273 = vmatpush1.msra.mxu0 %v176
    %274 = vmatprep.subr.mxu0 %v181
    %275 = vmatpush1.msra.mxu0 %v180
    %276 = vmatprep.subr.mxu0 %v185
    %277 = vmatpush1.msra.mxu0 %v184
    %278 = vmatprep.subr.mxu0 %v189
    %279 = vmatpush1.msra.mxu0 %v188
    %280 = vmatprep.subr.mxu0 %v193
    %281 = vmatpush1.msra.mxu0 %v192
    %282 = vmatprep.mubr.f32.mxu0 %v67
    %283 = vmatmul.mubr.f32.gmra.mrb[0].mxu0 %v66
    %v284 = vpop.f32.mrb[0].mxu0
    %v285 = vadd.f32 %v201, %v284
    %v286 = vpop.f32.mrb[0].mxu0
    %v287 = vadd.f32 %v205, %v286
    %288 = vdwg.mxu0
    %289 = vmatprep.subr.mxu0 %v71
    %290 = vmatpush1.msra.mxu0 %v70
    %291 = vmatprep.subr.mxu0 %v75
    %292 = vmatpush1.msra.mxu0 %v74
    %293 = vmatprep.subr.mxu0 %v79
    %294 = vmatpush1.msra.mxu0 %v78
    %295 = vmatprep.subr.mxu0 %v83
    %296 = vmatpush1.msra.mxu0 %v82
    %297 = vmatprep.subr.mxu0 %v87
    %298 = vmatpush1.msra.mxu0 %v86
    %299 = vmatprep.subr.mxu0 %v91
    %300 = vmatpush1.msra.mxu0 %v90
    %301 = vmatprep.subr.mxu0 %v95
    %302 = vmatpush1.msra.mxu0 %v94
    %303 = vmatprep.subr.mxu0 %v99
    %304 = vmatpush1.msra.mxu0 %v98
    %305 = vmatprep.subr.mxu0 %v103
    %306 = vmatpush1.msra.mxu0 %v102
    %307 = vmatprep.subr.mxu0 %v107
    %308 = vmatpush1.msra.mxu0 %v106
    %309 = vmatprep.subr.mxu0 %v111
    %310 = vmatpush1.msra.mxu0 %v110
    %311 = vmatprep.subr.mxu0 %v115
    %312 = vmatpush1.msra.mxu0 %v114
    %313 = vmatprep.subr.mxu0 %v119
    %314 = vmatpush1.msra.mxu0 %v118
    %315 = vmatprep.subr.mxu0 %v123
    %316 = vmatpush1.msra.mxu0 %v122
    %317 = vmatprep.subr.mxu0 %v127
    %318 = vmatpush1.msra.mxu0 %v126
    %319 = vmatprep.subr.mxu0 %v131
    %320 = vmatpush1.msra.mxu0 %v130
    %321 = vmatprep.subr.mxu0 %v135
    %322 = vmatpush1.msra.mxu0 %v134
    %323 = vmatprep.subr.mxu0 %v139
    %324 = vmatpush1.msra.mxu0 %v138
    %325 = vmatprep.subr.mxu0 %v143
    %326 = vmatpush1.msra.mxu0 %v142
    %327 = vmatprep.subr.mxu0 %v147
    %328 = vmatpush1.msra.mxu0 %v146
    %329 = vmatprep.subr.mxu0 %v151
    %330 = vmatpush1.msra.mxu0 %v150
    %331 = vmatprep.subr.mxu0 %v155
    %332 = vmatpush1.msra.mxu0 %v154
    %333 = vmatprep.subr.mxu0 %v159
    %334 = vmatpush1.msra.mxu0 %v158
    %335 = vmatprep.subr.mxu0 %v163
    %336 = vmatpush1.msra.mxu0 %v162
    %337 = vmatprep.subr.mxu0 %v167
    %338 = vmatpush1.msra.mxu0 %v166
    %339 = vmatprep.subr.mxu0 %v171
    %340 = vmatpush1.msra.mxu0 %v170
    %341 = vmatprep.subr.mxu0 %v175
    %342 = vmatpush1.msra.mxu0 %v174
    %343 = vmatprep.subr.mxu0 %v179
    %344 = vmatpush1.msra.mxu0 %v178
    %345 = vmatprep.subr.mxu0 %v183
    %346 = vmatpush1.msra.mxu0 %v182
    %347 = vmatprep.subr.mxu0 %v187
    %348 = vmatpush1.msra.mxu0 %v186
    %349 = vmatprep.subr.mxu0 %v191
    %350 = vmatpush1.msra.mxu0 %v190
    %351 = vmatprep.subr.mxu0 %v195
    %352 = vmatpush1.msra.mxu0 %v194
    %353 = vmatprep.mubr.f32.mxu0 %v67
    %354 = vmatmul.mubr.f32.gmra.mrb[0].mxu0 %v66
    %v355 = vpop.f32.mrb[0].mxu0
    %v356 = vadd.f32 %v209, %v355
    %v357 = vpop.f32.mrb[0].mxu0
    %v358 = vadd.f32 %v213, %v357
    %359 = vdwg.mxu0
    %v360 = vmax.f32 %v285, 0.0
    %v361 = vmax.f32 %v287, 0.0
    %v362 = vmax.f32 %v356, 0.0
    %v363 = vmax.f32 %v358, 0.0
    %v364 = vld [vmem:[#allocation4] sm:$0xff]
    %v365 = vld [vmem:[#allocation4 + $0x8] sm:$0xff]
    %v366 = vld [vmem:[#allocation4 + $0x10] sm:$0xff]
    %v367 = vld [vmem:[#allocation4 + $0x18] sm:$0xff]
    %v368 = vld [vmem:[#allocation4 + $0x20] sm:$0xff]
    %v369 = vld [vmem:[#allocation4 + $0x28] sm:$0xff]
    %v370 = vld [vmem:[#allocation4 + $0x30] sm:$0xff]
    %v371 = vld [vmem:[#allocation4 + $0x38] sm:$0xff]
    %v372 = vld [vmem:[#allocation4 + $0x40] sm:$0xff]
    %v373 = vld [vmem:[#allocation4 + $0x48] sm:$0xff]
    %v374 = vld [vmem:[#allocation4 + $0x50] sm:$0xff]
    %v375 = vld [vmem:[#allocation4 + $0x58] sm:$0xff]
    %v376 = vld [vmem:[#allocation4 + $0x60] sm:$0xff]
    %v377 = vld [vmem:[#allocation4 + $0x68] sm:$0xff]
    %v378 = vld [vmem:[#allocation4 + $0x70] sm:$0xff]
    %v379 = vld [vmem:[#allocation4 + $0x78] sm:$0xff]
    %v380 = vld [vmem:[#allocation4 + $0x80] sm:$0xff]
    %v381 = vld [vmem:[#allocation4 + $0x88] sm:$0xff]
    %v382 = vld [vmem:[#allocation4 + $0x90] sm:$0xff]
    %v383 = vld [vmem:[#allocation4 + $0x98] sm:$0xff]
    %v384 = vld [vmem:[#allocation4 + $0xa0] sm:$0xff]
    %v385 = vld [vmem:[#allocation4 + $0xa8] sm:$0xff]
    %v386 = vld [vmem:[#allocation4 + $0xb0] sm:$0xff]
    %v387 = vld [vmem:[#allocation4 + $0xb8] sm:$0xff]
    %v388 = vld [vmem:[#allocation4 + $0xc0] sm:$0xff]
    %v389 = vld [vmem:[#allocation4 + $0xc8] sm:$0xff]
    %v390 = vld [vmem:[#allocation4 + $0xd0] sm:$0xff]
    %v391 = vld [vmem:[#allocation4 + $0xd8] sm:$0xff]
    %v392 = vld [vmem:[#allocation4 + $0xe0] sm:$0xff]
    %v393 = vld [vmem:[#allocation4 + $0xe8] sm:$0xff]
    %v394 = vld [vmem:[#allocation4 + $0xf0] sm:$0xff]
    %v395 = vld [vmem:[#allocation4 + $0xf8] sm:$0xff]
    %v396 = vld [vmem:[#allocation4 + $0x100] sm:$0xff]
    %v397 = vld [vmem:[#allocation4 + $0x108] sm:$0xff]
    %v398 = vld [vmem:[#allocation4 + $0x110] sm:$0xff]
    %v399 = vld [vmem:[#allocation4 + $0x118] sm:$0xff]
    %v400 = vld [vmem:[#allocation4 + $0x120] sm:$0xff]
    %v401 = vld [vmem:[#allocation4 + $0x128] sm:$0xff]
    %v402 = vld [vmem:[#allocation4 + $0x130] sm:$0xff]
    %v403 = vld [vmem:[#allocation4 + $0x138] sm:$0xff]
    %v404 = vld [vmem:[#allocation4 + $0x140] sm:$0xff]
    %v405 = vld [vmem:[#allocation4 + $0x148] sm:$0xff]
    %v406 = vld [vmem:[#allocation4 + $0x150] sm:$0xff]
    %v407 = vld [vmem:[#allocation4 + $0x158] sm:$0xff]
    %v408 = vld [vmem:[#allocation4 + $0x160] sm:$0xff]
    %v409 = vld [vmem:[#allocation4 + $0x168] sm:$0xff]
    %v410 = vld [vmem:[#allocation4 + $0x170] sm:$0xff]
    %v411 = vld [vmem:[#allocation4 + $0x178] sm:$0xff]
    %v412 = vld [vmem:[#allocation4 + $0x180] sm:$0xff]
    %v413 = vld [vmem:[#allocation4 + $0x188] sm:$0xff]
    %v414 = vld [vmem:[#allocation4 + $0x190] sm:$0xff]
    %v415 = vld [vmem:[#allocation4 + $0x198] sm:$0xff]
    %v416 = vld [vmem:[#allocation4 + $0x1a0] sm:$0xff]
    %v417 = vld [vmem:[#allocation4 + $0x1a8] sm:$0xff]
    %v418 = vld [vmem:[#allocation4 + $0x1b0] sm:$0xff]
    %v419 = vld [vmem:[#allocation4 + $0x1b8] sm:$0xff]
    %v420 = vld [vmem:[#allocation4 + $0x1c0] sm:$0xff]
    %v421 = vld [vmem:[#allocation4 + $0x1c8] sm:$0xff]
    %v422 = vld [vmem:[#allocation4 + $0x1d0] sm:$0xff]
    %v423 = vld [vmem:[#allocation4 + $0x1d8] sm:$0xff]
    %v424 = vld [vmem:[#allocation4 + $0x1e0] sm:$0xff]
    %v425 = vld [vmem:[#allocation4 + $0x1e8] sm:$0xff]
    %v426 = vld [vmem:[#allocation4 + $0x1f0] sm:$0xff]
    %v427 = vld [vmem:[#allocation4 + $0x1f8] sm:$0xff]
    %v428 = vld [vmem:[#allocation4 + $0x200] sm:$0xff]
    %v429 = vld [vmem:[#allocation4 + $0x208] sm:$0xff]
    %v430 = vld [vmem:[#allocation4 + $0x210] sm:$0xff]
    %v431 = vld [vmem:[#allocation4 + $0x218] sm:$0xff]
    %v432 = vld [vmem:[#allocation4 + $0x220] sm:$0xff]
    %v433 = vld [vmem:[#allocation4 + $0x228] sm:$0xff]
    %v434 = vld [vmem:[#allocation4 + $0x230] sm:$0xff]
    %v435 = vld [vmem:[#allocation4 + $0x238] sm:$0xff]
    %v436 = vld [vmem:[#allocation4 + $0x240] sm:$0xff]
    %v437 = vld [vmem:[#allocation4 + $0x248] sm:$0xff]
    %v438 = vld [vmem:[#allocation4 + $0x250] sm:$0xff]
    %v439 = vld [vmem:[#allocation4 + $0x258] sm:$0xff]
    %v440 = vld [vmem:[#allocation4 + $0x260] sm:$0xff]
    %v441 = vld [vmem:[#allocation4 + $0x268] sm:$0xff]
    %v442 = vld [vmem:[#allocation4 + $0x270] sm:$0xff]
    %v443 = vld [vmem:[#allocation4 + $0x278] sm:$0xff]
    %v444 = vld [vmem:[#allocation4 + $0x280] sm:$0xff]
    %v445 = vld [vmem:[#allocation4 + $0x288] sm:$0xff]
    %v446 = vld [vmem:[#allocation4 + $0x290] sm:$0xff]
    %v447 = vld [vmem:[#allocation4 + $0x298] sm:$0xff]
    %v448 = vld [vmem:[#allocation4 + $0x2a0] sm:$0xff]
    %v449 = vld [vmem:[#allocation4 + $0x2a8] sm:$0xff]
    %v450 = vld [vmem:[#allocation4 + $0x2b0] sm:$0xff]
    %v451 = vld [vmem:[#allocation4 + $0x2b8] sm:$0xff]
    %v452 = vld [vmem:[#allocation4 + $0x2c0] sm:$0xff]
    %v453 = vld [vmem:[#allocation4 + $0x2c8] sm:$0xff]
    %v454 = vld [vmem:[#allocation4 + $0x2d0] sm:$0xff]
    %v455 = vld [vmem:[#allocation4 + $0x2d8] sm:$0xff]
    %v456 = vld [vmem:[#allocation4 + $0x2e0] sm:$0xff]
    %v457 = vld [vmem:[#allocation4 + $0x2e8] sm:$0xff]
    %v458 = vld [vmem:[#allocation4 + $0x2f0] sm:$0xff]
    %v459 = vld [vmem:[#allocation4 + $0x2f8] sm:$0xff]
    %v460 = vld [vmem:[#allocation4 + $0x300] sm:$0xff]
    %v461 = vld [vmem:[#allocation4 + $0x308] sm:$0xff]
    %v462 = vld [vmem:[#allocation4 + $0x310] sm:$0xff]
    %v463 = vld [vmem:[#allocation4 + $0x318] sm:$0xff]
    %v464 = vld [vmem:[#allocation4 + $0x320] sm:$0xff]
    %v465 = vld [vmem:[#allocation4 + $0x328] sm:$0xff]
    %v466 = vld [vmem:[#allocation4 + $0x330] sm:$0xff]
    %v467 = vld [vmem:[#allocation4 + $0x338] sm:$0xff]
    %v468 = vld [vmem:[#allocation4 + $0x340] sm:$0xff]
    %v469 = vld [vmem:[#allocation4 + $0x348] sm:$0xff]
    %v470 = vld [vmem:[#allocation4 + $0x350] sm:$0xff]
    %v471 = vld [vmem:[#allocation4 + $0x358] sm:$0xff]
    %v472 = vld [vmem:[#allocation4 + $0x360] sm:$0xff]
    %v473 = vld [vmem:[#allocation4 + $0x368] sm:$0xff]
    %v474 = vld [vmem:[#allocation4 + $0x370] sm:$0xff]
    %v475 = vld [vmem:[#allocation4 + $0x378] sm:$0xff]
    %v476 = vld [vmem:[#allocation4 + $0x380] sm:$0xff]
    %v477 = vld [vmem:[#allocation4 + $0x388] sm:$0xff]
    %v478 = vld [vmem:[#allocation4 + $0x390] sm:$0xff]
    %v479 = vld [vmem:[#allocation4 + $0x398] sm:$0xff]
    %v480 = vld [vmem:[#allocation4 + $0x3a0] sm:$0xff]
    %v481 = vld [vmem:[#allocation4 + $0x3a8] sm:$0xff]
    %v482 = vld [vmem:[#allocation4 + $0x3b0] sm:$0xff]
    %v483 = vld [vmem:[#allocation4 + $0x3b8] sm:$0xff]
    %v484 = vld [vmem:[#allocation4 + $0x3c0] sm:$0xff]
    %v485 = vld [vmem:[#allocation4 + $0x3c8] sm:$0xff]
    %v486 = vld [vmem:[#allocation4 + $0x3d0] sm:$0xff]
    %v487 = vld [vmem:[#allocation4 + $0x3d8] sm:$0xff]
    %v488 = vld [vmem:[#allocation4 + $0x3e0] sm:$0xff]
    %v489 = vld [vmem:[#allocation4 + $0x3e8] sm:$0xff]
    %v490 = vld [vmem:[#allocation4 + $0x3f0] sm:$0xff]
    %v491 = vld [vmem:[#allocation4 + $0x3f8] sm:$0xff]
    %v492 = vld [vmem:[%s4] sm:$0x3]
    %v494 = vlaneseq
    %v495 = vshrl.u32 %v494, 7
    %v496 = vsub.s32 0, %v495
    %v497 = vrot.slane %v492, %v496
    %v498 = vlaneseq
    %v499 = vshrl.u32 %v498, 7
    %v500 = vsub.s32 1, %v499
    %v501 = vrot.slane %v492, %v500
    %504 = vmatprep.subr.mxu0 %v365
    %505 = vmatpush1.msra.mxu0 %v364
    %506 = vmatprep.subr.mxu0 %v367
    %507 = vmatpush1.msra.mxu0 %v366
    %508 = vmatprep.subr.mxu0 %v369
    %509 = vmatpush1.msra.mxu0 %v368
    %510 = vmatprep.subr.mxu0 %v371
    %511 = vmatpush1.msra.mxu0 %v370
    %512 = vmatprep.subr.mxu0 %v373
    %513 = vmatpush1.msra.mxu0 %v372
    %514 = vmatprep.subr.mxu0 %v375
    %515 = vmatpush1.msra.mxu0 %v374
    %516 = vmatprep.subr.mxu0 %v377
    %517 = vmatpush1.msra.mxu0 %v376
    %518 = vmatprep.subr.mxu0 %v379
    %519 = vmatpush1.msra.mxu0 %v378
    %520 = vmatprep.subr.mxu0 %v381
    %521 = vmatpush1.msra.mxu0 %v380
    %522 = vmatprep.subr.mxu0 %v383
    %523 = vmatpush1.msra.mxu0 %v382
    %524 = vmatprep.subr.mxu0 %v385
    %525 = vmatpush1.msra.mxu0 %v384
    %526 = vmatprep.subr.mxu0 %v387
    %527 = vmatpush1.msra.mxu0 %v386
    %528 = vmatprep.subr.mxu0 %v389
    %529 = vmatpush1.msra.mxu0 %v388
    %530 = vmatprep.subr.mxu0 %v391
    %531 = vmatpush1.msra.mxu0 %v390
    %532 = vmatprep.subr.mxu0 %v393
    %533 = vmatpush1.msra.mxu0 %v392
    %534 = vmatprep.subr.mxu0 %v395
    %535 = vmatpush1.msra.mxu0 %v394
    %536 = vmatprep.subr.mxu0 %v397
    %537 = vmatpush1.msra.mxu0 %v396
    %538 = vmatprep.subr.mxu0 %v399
    %539 = vmatpush1.msra.mxu0 %v398
    %540 = vmatprep.subr.mxu0 %v401
    %541 = vmatpush1.msra.mxu0 %v400
    %542 = vmatprep.subr.mxu0 %v403
    %543 = vmatpush1.msra.mxu0 %v402
    %544 = vmatprep.subr.mxu0 %v405
    %545 = vmatpush1.msra.mxu0 %v404
    %546 = vmatprep.subr.mxu0 %v407
    %547 = vmatpush1.msra.mxu0 %v406
    %548 = vmatprep.subr.mxu0 %v409
    %549 = vmatpush1.msra.mxu0 %v408
    %550 = vmatprep.subr.mxu0 %v411
    %551 = vmatpush1.msra.mxu0 %v410
    %552 = vmatprep.subr.mxu0 %v413
    %553 = vmatpush1.msra.mxu0 %v412
    %554 = vmatprep.subr.mxu0 %v415
    %555 = vmatpush1.msra.mxu0 %v414
    %556 = vmatprep.subr.mxu0 %v417
    %557 = vmatpush1.msra.mxu0 %v416
    %558 = vmatprep.subr.mxu0 %v419
    %559 = vmatpush1.msra.mxu0 %v418
    %560 = vmatprep.subr.mxu0 %v421
    %561 = vmatpush1.msra.mxu0 %v420
    %562 = vmatprep.subr.mxu0 %v423
    %563 = vmatpush1.msra.mxu0 %v422
    %564 = vmatprep.subr.mxu0 %v425
    %565 = vmatpush1.msra.mxu0 %v424
    %566 = vmatprep.subr.mxu0 %v427
    %567 = vmatpush1.msra.mxu0 %v426
    %568 = vmatprep.mubr.f32.mxu0 %v361
    %569 = vmatmul.mubr.f32.gmra.mrb[0].mxu0 %v360
    %v570 = vpop.f32.mrb[0].mxu0
    %v571 = vadd.f32 %v497, %v570
    %v572 = vpop.f32.mrb[0].mxu0
    %v573 = vadd.f32 %v501, %v572
    %574 = vdwg.mxu0
    %575 = vmatprep.subr.mxu0 %v429
    %576 = vmatpush1.msra.mxu0 %v428
    %577 = vmatprep.subr.mxu0 %v431
    %578 = vmatpush1.msra.mxu0 %v430
    %579 = vmatprep.subr.mxu0 %v433
    %580 = vmatpush1.msra.mxu0 %v432
    %581 = vmatprep.subr.mxu0 %v435
    %582 = vmatpush1.msra.mxu0 %v434
    %583 = vmatprep.subr.mxu0 %v437
    %584 = vmatpush1.msra.mxu0 %v436
    %585 = vmatprep.subr.mxu0 %v439
    %586 = vmatpush1.msra.mxu0 %v438
    %587 = vmatprep.subr.mxu0 %v441
    %588 = vmatpush1.msra.mxu0 %v440
    %589 = vmatprep.subr.mxu0 %v443
    %590 = vmatpush1.msra.mxu0 %v442
    %591 = vmatprep.subr.mxu0 %v445
    %592 = vmatpush1.msra.mxu0 %v444
    %593 = vmatprep.subr.mxu0 %v447
    %594 = vmatpush1.msra.mxu0 %v446
    %595 = vmatprep.subr.mxu0 %v449
    %596 = vmatpush1.msra.mxu0 %v448
    %597 = vmatprep.subr.mxu0 %v451
    %598 = vmatpush1.msra.mxu0 %v450
    %599 = vmatprep.subr.mxu0 %v453
    %600 = vmatpush1.msra.mxu0 %v452
    %601 = vmatprep.subr.mxu0 %v455
    %602 = vmatpush1.msra.mxu0 %v454
    %603 = vmatprep.subr.mxu0 %v457
    %604 = vmatpush1.msra.mxu0 %v456
    %605 = vmatprep.subr.mxu0 %v459
    %606 = vmatpush1.msra.mxu0 %v458
    %607 = vmatprep.subr.mxu0 %v461
    %608 = vmatpush1.msra.mxu0 %v460
    %609 = vmatprep.subr.mxu0 %v463
    %610 = vmatpush1.msra.mxu0 %v462
    %611 = vmatprep.subr.mxu0 %v465
    %612 = vmatpush1.msra.mxu0 %v464
    %613 = vmatprep.subr.mxu0 %v467
    %614 = vmatpush1.msra.mxu0 %v466
    %615 = vmatprep.subr.mxu0 %v469
    %616 = vmatpush1.msra.mxu0 %v468
    %617 = vmatprep.subr.mxu0 %v471
    %618 = vmatpush1.msra.mxu0 %v470
    %619 = vmatprep.subr.mxu0 %v473
    %620 = vmatpush1.msra.mxu0 %v472
    %621 = vmatprep.subr.mxu0 %v475
    %622 = vmatpush1.msra.mxu0 %v474
    %623 = vmatprep.subr.mxu0 %v477
    %624 = vmatpush1.msra.mxu0 %v476
    %625 = vmatprep.subr.mxu0 %v479
    %626 = vmatpush1.msra.mxu0 %v478
    %627 = vmatprep.subr.mxu0 %v481
    %628 = vmatpush1.msra.mxu0 %v480
    %629 = vmatprep.subr.mxu0 %v483
    %630 = vmatpush1.msra.mxu0 %v482
    %631 = vmatprep.subr.mxu0 %v485
    %632 = vmatpush1.msra.mxu0 %v484
    %633 = vmatprep.subr.mxu0 %v487
    %634 = vmatpush1.msra.mxu0 %v486
    %635 = vmatprep.subr.mxu0 %v489
    %636 = vmatpush1.msra.mxu0 %v488
    %637 = vmatprep.subr.mxu0 %v491
    %638 = vmatpush1.msra.mxu0 %v490
    %639 = vmatprep.mubr.f32.mxu0 %v363
    %640 = vmatmul.mubr.f32.gmra.mrb[0].mxu0 %v362
    %v641 = vpop.f32.mrb[0].mxu0
    %v642 = vadd.f32 %v571, %v641
    %v643 = vpop.f32.mrb[0].mxu0
    %v644 = vadd.f32 %v573, %v643
    %645 = vdwg.mxu0
    %v646 = vmax.f32 %v642, 0.0
    %v647 = vmax.f32 %v644, 0.0
    %v648 = vld [vmem:[%s5] sm:$0xff]
    %v649 = vld [vmem:[%s5 + $0x8] sm:$0xff]
    %v650 = vld [vmem:[%s5 + $0x10] sm:$0xff]
    %v651 = vld [vmem:[%s5 + $0x18] sm:$0xff]
    %v652 = vld [vmem:[%s5 + $0x20] sm:$0xff]
    %v653 = vld [vmem:[%s5 + $0x28] sm:$0xff]
    %v654 = vld [vmem:[%s5 + $0x30] sm:$0xff]
    %v655 = vld [vmem:[%s5 + $0x38] sm:$0xff]
    %v656 = vld [vmem:[%s5 + $0x40] sm:$0xff]
    %v657 = vld [vmem:[%s5 + $0x48] sm:$0xff]
    %v658 = vld [vmem:[%s5 + $0x50] sm:$0xff]
    %v659 = vld [vmem:[%s5 + $0x58] sm:$0xff]
    %v660 = vld [vmem:[%s5 + $0x60] sm:$0xff]
    %v661 = vld [vmem:[%s5 + $0x68] sm:$0xff]
    %v662 = vld [vmem:[%s5 + $0x70] sm:$0xff]
    %v663 = vld [vmem:[%s5 + $0x78] sm:$0xff]
    %v664 = vld [vmem:[%s5 + $0x80] sm:$0xff]
    %v665 = vld [vmem:[%s5 + $0x88] sm:$0xff]
    %v666 = vld [vmem:[%s5 + $0x90] sm:$0xff]
    %v667 = vld [vmem:[%s5 + $0x98] sm:$0xff]
    %v668 = vld [vmem:[%s5 + $0xa0] sm:$0xff]
    %v669 = vld [vmem:[%s5 + $0xa8] sm:$0xff]
    %v670 = vld [vmem:[%s5 + $0xb0] sm:$0xff]
    %v671 = vld [vmem:[%s5 + $0xb8] sm:$0xff]
    %v672 = vld [vmem:[%s5 + $0xc0] sm:$0xff]
    %v673 = vld [vmem:[%s5 + $0xc8] sm:$0xff]
    %v674 = vld [vmem:[%s5 + $0xd0] sm:$0xff]
    %v675 = vld [vmem:[%s5 + $0xd8] sm:$0xff]
    %v676 = vld [vmem:[%s5 + $0xe0] sm:$0xff]
    %v677 = vld [vmem:[%s5 + $0xe8] sm:$0xff]
    %v678 = vld [vmem:[%s5 + $0xf0] sm:$0xff]
    %v679 = vld [vmem:[%s5 + $0xf8] sm:$0xff]
    %v680 = vld [vmem:[%s6] sm:$0x1]
    %v682 = vlaneseq
    %v683 = vshrl.u32 %v682, 7
    %v684 = vsub.s32 0, %v683
    %v685 = vrot.slane %v680, %v684
    %687 = vmatprep.subr.mxu0 0.0
    %688 = vmatpush1.msra.mxu0 %v648
    %689 = vmatprep.subr.mxu0 0.0
    %690 = vmatpush1.msra.mxu0 %v649
    %691 = vmatprep.subr.mxu0 0.0
    %692 = vmatpush1.msra.mxu0 %v650
    %693 = vmatprep.subr.mxu0 0.0
    %694 = vmatpush1.msra.mxu0 %v651
    %695 = vmatprep.subr.mxu0 0.0
    %696 = vmatpush1.msra.mxu0 %v652
    %697 = vmatprep.subr.mxu0 0.0
    %698 = vmatpush1.msra.mxu0 %v653
    %699 = vmatprep.subr.mxu0 0.0
    %700 = vmatpush1.msra.mxu0 %v654
    %701 = vmatprep.subr.mxu0 0.0
    %702 = vmatpush1.msra.mxu0 %v655
    %703 = vmatprep.subr.mxu0 0.0
    %704 = vmatpush1.msra.mxu0 %v656
    %705 = vmatprep.subr.mxu0 0.0
    %706 = vmatpush1.msra.mxu0 %v657
    %707 = vmatprep.subr.mxu0 0.0
    %708 = vmatpush1.msra.mxu0 %v658
    %709 = vmatprep.subr.mxu0 0.0
    %710 = vmatpush1.msra.mxu0 %v659
    %711 = vmatprep.subr.mxu0 0.0
    %712 = vmatpush1.msra.mxu0 %v660
    %713 = vmatprep.subr.mxu0 0.0
    %714 = vmatpush1.msra.mxu0 %v661
    %715 = vmatprep.subr.mxu0 0.0
    %716 = vmatpush1.msra.mxu0 %v662
    %717 = vmatprep.subr.mxu0 0.0
    %718 = vmatpush1.msra.mxu0 %v663
    %719 = vmatprep.subr.mxu0 0.0
    %720 = vmatpush1.msra.mxu0 %v664
    %721 = vmatprep.subr.mxu0 0.0
    %722 = vmatpush1.msra.mxu0 %v665
    %723 = vmatprep.subr.mxu0 0.0
    %724 = vmatpush1.msra.mxu0 %v666
    %725 = vmatprep.subr.mxu0 0.0
    %726 = vmatpush1.msra.mxu0 %v667
    %727 = vmatprep.subr.mxu0 0.0
    %728 = vmatpush1.msra.mxu0 %v668
    %729 = vmatprep.subr.mxu0 0.0
    %730 = vmatpush1.msra.mxu0 %v669
    %731 = vmatprep.subr.mxu0 0.0
    %732 = vmatpush1.msra.mxu0 %v670
    %733 = vmatprep.subr.mxu0 0.0
    %734 = vmatpush1.msra.mxu0 %v671
    %735 = vmatprep.subr.mxu0 0.0
    %736 = vmatpush1.msra.mxu0 %v672
    %737 = vmatprep.subr.mxu0 0.0
    %738 = vmatpush1.msra.mxu0 %v673
    %739 = vmatprep.subr.mxu0 0.0
    %740 = vmatpush1.msra.mxu0 %v674
    %741 = vmatprep.subr.mxu0 0.0
    %742 = vmatpush1.msra.mxu0 %v675
    %743 = vmatprep.subr.mxu0 0.0
    %744 = vmatpush1.msra.mxu0 %v676
    %745 = vmatprep.subr.mxu0 0.0
    %746 = vmatpush1.msra.mxu0 %v677
    %747 = vmatprep.subr.mxu0 0.0
    %748 = vmatpush1.msra.mxu0 %v678
    %749 = vmatprep.subr.mxu0 0.0
    %750 = vmatpush1.msra.mxu0 %v679
    %751 = vmatprep.mubr.f32.mxu0 %v647
    %752 = vmatmul.mubr.f32.gmra.mrb[0].mxu0 %v646
    %v753 = vpop.f32.mrb[0].mxu0
    %v754 = vadd.f32 %v685, %v753
    %v755 = vpop.f32.mrb[0].mxu0
    %756 = vdwg.mxu0
    %v757 = vmax.f32 %v754, 0.0
    %v758 = vld [vmem:[%s7] sm:$0xff]
    %v759 = vld [vmem:[%s7 + $0x8] sm:$0xff]
    %v760 = vld [vmem:[%s7 + $0x10] sm:$0xff]
    %v761 = vld [vmem:[%s7 + $0x18] sm:$0xff]
    %v762 = vld [vmem:[%s8] sm:$0x1]
    %v764 = vlaneseq
    %v765 = vshrl.u32 %v764, 7
    %v766 = vsub.s32 0, %v765
    %v767 = vrot.slane %v762, %v766
    %vm769 = vcmask 261120
    %v771 = vsel %vm769, %v757, 0
    %773 = vmatprep.subr.mxu0 0.0
    %774 = vmatpush1.msra.mxu0 %v758
    %775 = vmatprep.subr.mxu0 0.0
    %776 = vmatpush1.msra.mxu0 %v759
    %777 = vmatprep.subr.mxu0 0.0
    %778 = vmatpush1.msra.mxu0 %v760
    %779 = vmatprep.subr.mxu0 0.0
    %780 = vmatpush1.msra.mxu0 %v761
    %781 = vmatprep.subr.mxu0 0.0
    %782 = vmatpush1.msra.mxu0 0.0
    %783 = vmatprep.subr.mxu0 0.0
    %784 = vmatpush1.msra.mxu0 0.0
    %785 = vmatprep.subr.mxu0 0.0
    %786 = vmatpush1.msra.mxu0 0.0
    %787 = vmatprep.subr.mxu0 0.0
    %788 = vmatpush1.msra.mxu0 0.0
    %789 = vmatprep.subr.mxu0 0.0
    %790 = vmatpush1.msra.mxu0 0.0
    %791 = vmatprep.subr.mxu0 0.0
    %792 = vmatpush1.msra.mxu0 0.0
    %793 = vmatprep.subr.mxu0 0.0
    %794 = vmatpush1.msra.mxu0 0.0
    %795 = vmatprep.subr.mxu0 0.0
    %796 = vmatpush1.msra.mxu0 0.0
    %797 = vmatprep.subr.mxu0 0.0
    %798 = vmatpush1.msra.mxu0 0.0
    %799 = vmatprep.subr.mxu0 0.0
    %800 = vmatpush1.msra.mxu0 0.0
    %801 = vmatprep.subr.mxu0 0.0
    %802 = vmatpush1.msra.mxu0 0.0
    %803 = vmatprep.subr.mxu0 0.0
    %804 = vmatpush1.msra.mxu0 0.0
    %805 = vmatprep.subr.mxu0 0.0
    %806 = vmatpush1.msra.mxu0 0.0
    %807 = vmatprep.subr.mxu0 0.0
    %808 = vmatpush1.msra.mxu0 0.0
    %809 = vmatprep.subr.mxu0 0.0
    %810 = vmatpush1.msra.mxu0 0.0
    %811 = vmatprep.subr.mxu0 0.0
    %812 = vmatpush1.msra.mxu0 0.0
    %813 = vmatprep.subr.mxu0 0.0
    %814 = vmatpush1.msra.mxu0 0.0
    %815 = vmatprep.subr.mxu0 0.0
    %816 = vmatpush1.msra.mxu0 0.0
    %817 = vmatprep.subr.mxu0 0.0
    %818 = vmatpush1.msra.mxu0 0.0
    %819 = vmatprep.subr.mxu0 0.0
    %820 = vmatpush1.msra.mxu0 0.0
    %821 = vmatprep.subr.mxu0 0.0
    %822 = vmatpush1.msra.mxu0 0.0
    %823 = vmatprep.subr.mxu0 0.0
    %824 = vmatpush1.msra.mxu0 0.0
    %825 = vmatprep.subr.mxu0 0.0
    %826 = vmatpush1.msra.mxu0 0.0
    %827 = vmatprep.subr.mxu0 0.0
    %828 = vmatpush1.msra.mxu0 0.0
    %829 = vmatprep.subr.mxu0 0.0
    %830 = vmatpush1.msra.mxu0 0.0
    %831 = vmatprep.subr.mxu0 0.0
    %832 = vmatpush1.msra.mxu0 0.0
    %833 = vmatprep.subr.mxu0 0.0
    %834 = vmatpush1.msra.mxu0 0.0
    %835 = vmatprep.subr.mxu0 0.0
    %836 = vmatpush1.msra.mxu0 0.0
    %837 = vmatprep.mubr.f32.mxu0 0.0
    %838 = vmatmul.mubr.f32.gmra.mrb[0].mxu0 %v771
    %v839 = vpop.f32.mrb[0].mxu0
    %v840 = vadd.f32 %v767, %v839
    %v841 = vpop.f32.mrb[0].mxu0
    %842 = vdwg.mxu0
    %v843 = vmax.f32 %v840, 0.0
    %v844 = vld [vmem:[%s9] sm:$0xff]
    %v845 = vld [vmem:[%s9 + $0x8] sm:$0xff]
    %v846 = vld [vmem:[%s9 + $0x10] sm:$0xff]
    %v847 = vld [vmem:[%s9 + $0x18] sm:$0xff]
    %v848 = vld [vmem:[%s10] sm:$0x1]
    %v850 = vlaneseq
    %v851 = vshrl.u32 %v850, 7
    %v852 = vsub.s32 0, %v851
    %v853 = vrot.slane %v848, %v852
    %v856 = vsel %vm769, %v843, 0
    %858 = vmatprep.subr.mxu0 0.0
    %859 = vmatpush1.msra.mxu0 %v844
    %860 = vmatprep.subr.mxu0 0.0
    %861 = vmatpush1.msra.mxu0 %v845
    %862 = vmatprep.subr.mxu0 0.0
    %863 = vmatpush1.msra.mxu0 %v846
    %864 = vmatprep.subr.mxu0 0.0
    %865 = vmatpush1.msra.mxu0 %v847
    %866 = vmatprep.subr.mxu0 0.0
    %867 = vmatpush1.msra.mxu0 0.0
    %868 = vmatprep.subr.mxu0 0.0
    %869 = vmatpush1.msra.mxu0 0.0
    %870 = vmatprep.subr.mxu0 0.0
    %871 = vmatpush1.msra.mxu0 0.0
    %872 = vmatprep.subr.mxu0 0.0
    %873 = vmatpush1.msra.mxu0 0.0
    %874 = vmatprep.subr.mxu0 0.0
    %875 = vmatpush1.msra.mxu0 0.0
    %876 = vmatprep.subr.mxu0 0.0
    %877 = vmatpush1.msra.mxu0 0.0
    %878 = vmatprep.subr.mxu0 0.0
    %879 = vmatpush1.msra.mxu0 0.0
    %880 = vmatprep.subr.mxu0 0.0
    %881 = vmatpush1.msra.mxu0 0.0
    %882 = vmatprep.subr.mxu0 0.0
    %883 = vmatpush1.msra.mxu0 0.0
    %884 = vmatprep.subr.mxu0 0.0
    %885 = vmatpush1.msra.mxu0 0.0
    %886 = vmatprep.subr.mxu0 0.0
    %887 = vmatpush1.msra.mxu0 0.0
    %888 = vmatprep.subr.mxu0 0.0
    %889 = vmatpush1.msra.mxu0 0.0
    %890 = vmatprep.subr.mxu0 0.0
    %891 = vmatpush1.msra.mxu0 0.0
    %892 = vmatprep.subr.mxu0 0.0
    %893 = vmatpush1.msra.mxu0 0.0
    %894 = vmatprep.subr.mxu0 0.0
    %895 = vmatpush1.msra.mxu0 0.0
    %896 = vmatprep.subr.mxu0 0.0
    %897 = vmatpush1.msra.mxu0 0.0
    %898 = vmatprep.subr.mxu0 0.0
    %899 = vmatpush1.msra.mxu0 0.0
    %900 = vmatprep.subr.mxu0 0.0
    %901 = vmatpush1.msra.mxu0 0.0
    %902 = vmatprep.subr.mxu0 0.0
    %903 = vmatpush1.msra.mxu0 0.0
    %904 = vmatprep.subr.mxu0 0.0
    %905 = vmatpush1.msra.mxu0 0.0
    %906 = vmatprep.subr.mxu0 0.0
    %907 = vmatpush1.msra.mxu0 0.0
    %908 = vmatprep.subr.mxu0 0.0
    %909 = vmatpush1.msra.mxu0 0.0
    %910 = vmatprep.subr.mxu0 0.0
    %911 = vmatpush1.msra.mxu0 0.0
    %912 = vmatprep.subr.mxu0 0.0
    %913 = vmatpush1.msra.mxu0 0.0
    %914 = vmatprep.subr.mxu0 0.0
    %915 = vmatpush1.msra.mxu0 0.0
    %916 = vmatprep.subr.mxu0 0.0
    %917 = vmatpush1.msra.mxu0 0.0
    %918 = vmatprep.subr.mxu0 0.0
    %919 = vmatpush1.msra.mxu0 0.0
    %920 = vmatprep.subr.mxu0 0.0
    %921 = vmatpush1.msra.mxu0 0.0
    %922 = vmatprep.mubr.f32.mxu0 0.0
    %923 = vmatmul.mubr.f32.gmra.mrb[0].mxu0 %v856
    %v924 = vpop.f32.mrb[0].mxu0
    %v925 = vadd.f32 %v853, %v924
    %v926 = vpop.f32.mrb[0].mxu0
    %927 = vdwg.mxu0
    %928 = vst [vmem:[%s11] sm:$0xff] %v925
    // Predicated region
    $region54: #{encoder_forward.1} parent=1 // pred_check
      _
    $region55: #{encoder_forward.1} parent=1 // pred_check_branch
      %930 = sbr.rel (0) target = $region57
    $region56: #{encoder_forward.1} parent=1 // pred_region
      _
    $region57: #{encoder_forward.1} parent=1 // pred_fallthru
      _
    // Predicated region
    $region58: #{encoder_forward.1} parent=1 // pred_check
      _
    $region59: #{encoder_forward.1} parent=1 // pred_check_branch
      %932 = sbr.rel (0) target = $region61
    $region60: #{encoder_forward.1} parent=1 // pred_region
      _
    $region61: #{encoder_forward.1} parent=1 // pred_fallthru
      _
    %933 = vsyncpa [#allocation3], 1
    %934 = vsyncpa [#allocation5], 1

</llo_original>
